<compile_context>
chip_gen: v7x
topology: tpu7x:2x2x1
jax: 0.10.0
libtpu: 0.0.40
codegen_flags: <defaults>
</compile_context>

<pallas_src>
import jax
import jax.numpy as jnp
from jax import lax
from jax.experimental import pallas as pl
from jax.experimental.pallas import tpu as pltpu


def _make_saln_kernel(c_channels, fold, lane_width, eps):
    """Builds the kernel closure for given (C, fold, L, eps)."""
    inv_c = 1.0 / float(c_channels)

    def kernel(x_ref, gb_ref, o_ref):
        # x_ref/o_ref: (tR, L)   gb_ref: (2, L) f32  [row 0 = gamma, row 1 = beta]
        x = x_ref[...].astype(jnp.float32)
        gamma = gb_ref[0:1, :]            # (1, L) f32, broadcast over rows
        beta = gb_ref[1:2, :]

        if fold == 1:
            # Plain per-row LayerNorm over the (full-extent) channel axis.
            mean = jnp.mean(x, axis=-1, keepdims=True)
            centered = x - mean
            var = jnp.mean(centered * centered, axis=-1, keepdims=True)
            normed = centered * lax.rsqrt(var + eps)
        else:
            # Each 128-lane row holds `fold` independent C-wide segments.
            # Segment stats via full-width masked reductions (exact f32).
            lane = lax.broadcasted_iota(jnp.int32, (1, lane_width), 1)
            normed = jnp.zeros_like(x)
            for j in range(fold):  # fold <= 16, statically unrolled
                m = ((lane >= j * c_channels) &
                     (lane < (j + 1) * c_channels)).astype(jnp.float32)   # (1, L)
                mean_j = jnp.sum(x * m, axis=-1, keepdims=True) * inv_c   # (tR, 1)
                cj = x - mean_j
                var_j = jnp.sum(cj * cj * m, axis=-1, keepdims=True) * inv_c
                normed = normed + (m * cj) * lax.rsqrt(var_j + eps)

        o_ref[...] = (gamma * normed + beta).astype(o_ref.dtype)

    return kernel


def style_adaptive_layer_norm(x, c, w, b, eps=1e-5):
    """SALN forward.

    x: (B, T, C)  input features
    c: (B, 1, Dc) conditioning vector
    w: (2C, Dc)   nn.Linear weight (PyTorch layout)
    b: (2C,)      nn.Linear bias
    """
    B, T, C = x.shape
    itemsize = jnp.dtype(x.dtype).itemsize

    # ---- hoisted style projection (kept f32 end-to-end) ---------------------
    params = jnp.dot(c[:, 0, :].astype(jnp.float32),
                     w.astype(jnp.float32).T,
                     preferred_element_type=jnp.float32) + b.astype(jnp.float32)
    gamma, beta = params[:, :C], params[:, C:]            # (B, C) f32 each

    # ---- lane-dense fold ----------------------------------------------------
    if C % 128 == 0:
        fold = 1
    elif C >= 8 and 128 % C == 0 and T % (128 // C) == 0:
        fold = 128 // C
    else:
        fold = 1  # TODO(synk): pad C to a multiple of 128 + mask padded channels
    L = fold * C
    R = T // fold
    xr = x.reshape(B, R, L)                               # free contiguous reshape
    gb = jnp.stack([jnp.tile(gamma, (1, fold)),
                    jnp.tile(beta, (1, fold))], axis=1)   # (B, 2, L) f32

    # ---- tile sizing / VMEM budget (generation-aware) -----------------------
    sub = {4: 8, 2: 16, 1: 32}.get(itemsize, 8)           # dtype sublane multiple
    try:
        vmem_cap = int(pltpu.get_tpu_info().vmem_capacity_bytes)
    except Exception:
        vmem_cap = 64 * 1024 * 1024                       # v7x-conservative fallback

    # Per-row VMEM: double-buffered in + out tiles plus ~4 f32 full-tile temps.
    per_row = L * (4 * itemsize + 4 * 4)
    budget = min(vmem_cap // 2, 24 * 1024 * 1024)
    rows_cap = max(sub, budget // max(per_row, 1))

    if R <= rows_cap:
        tR = R                                            # full extent: always legal
    else:
        tR = max(sub, (rows_cap // sub) * sub)
        d = tR
        while d > sub and R % d:
            d -= sub
        if R % d == 0:
            tR = d                                        # avoid masked partial last tile

    grid = (B, pl.cdiv(R, tR))
    need = tR * L * (4 * itemsize + 4 * 4) + (2 << 20)
    vmem_limit = int(max(16 << 20, min(need, (vmem_cap * 3) // 4)))

    cost = pl.CostEstimate(
        flops=int(B * T * C * (6 + 8 * fold)),
        transcendentals=int(B * T),
        bytes_accessed=int(2 * B * T * C * itemsize + 2 * B * L * 4),
    )

    kernel = _make_saln_kernel(C, fold, L, eps)

    out_r = pl.pallas_call(
        kernel,
        out_shape=jax.ShapeDtypeStruct((B, R, L), x.dtype),
        grid_spec=pl.GridSpec(
            grid=grid,
            in_specs=[
                pl.BlockSpec((pl.Squeezed(), tR, L), lambda bi, ti: (bi, ti, 0)),
                pl.BlockSpec((pl.Squeezed(), 2, L), lambda bi, ti: (bi, 0, 0)),
            ],
            out_specs=pl.BlockSpec((pl.Squeezed(), tR, L), lambda bi, ti: (bi, ti, 0)),
        ),
        compiler_params=pltpu.CompilerParams(
            dimension_semantics=("parallel", "parallel"),
            vmem_limit_bytes=vmem_limit,
        ),
        cost_estimate=cost,
    )(xr, gb)

    return out_r.reshape(B, T, C)


if __name__ == "__main__":
    B, T, C, Dc = 2, 8, 32, 16

    key = jax.random.PRNGKey(0)
    kx, kc, kw = jax.random.split(key, 3)

    x = jax.random.normal(kx, (B, T, C), dtype=jnp.float32)
    c = jax.random.normal(kc, (B, 1, Dc), dtype=jnp.float32)

    # nn.Linear(cond_channels, 2*in_channels): weight (2C, Dc), bias (2C,)
    # reset_parameters: bias[:C] = 1, bias[C:] = 0
    w = jax.random.normal(kw, (2 * C, Dc), dtype=jnp.float32) * 0.02
    b = jnp.concatenate([jnp.ones((C,), jnp.float32),
                         jnp.zeros((C,), jnp.float32)])

    out = style_adaptive_layer_norm(x, c, w, b)
    out = jax.block_until_ready(out)

    # reference in plain JAX (mirrors the PyTorch forward)
    params_ref = jnp.einsum("bsd,od->bso", c, w) + b
    gamma_ref, beta_ref = params_ref[..., :C], params_ref[..., C:]
    mean = jnp.mean(x, axis=-1, keepdims=True)
    var = jnp.mean((x - mean) ** 2, axis=-1, keepdims=True)
    normed_ref = (x - mean) / jnp.sqrt(var + 1e-5)
    out_ref = gamma_ref * normed_ref + beta_ref

    assert out.shape == (B, T, C)
    assert jnp.allclose(out, out_ref, atol=1e-5, rtol=1e-5)
    print("KERNEL_OK")
</pallas_src>

<mosaic_0001>
module attributes {stable_mosaic.version = 11 : i64} {
  func.func @kernel(%arg0: i32, %arg1: i32, %arg2: memref<1x2x128xf32, #tpu.memory_space<vmem>>, %arg3: memref<1x2x128xf32, #tpu.memory_space<vmem>>, %arg4: memref<1x2x128xf32, #tpu.memory_space<vmem>>) attributes {dimension_semantics = [#tpu.dimension_semantics<parallel>, #tpu.dimension_semantics<parallel>], iteration_bounds = array<i64: 2, 1>, scalar_prefetch = 0 : i64, scratch_operands = 0 : i64, tpu.core_type = #tpu.core_type<tc>, window_params = [{transform_indices = @transform_0, window_bounds = array<i64: 1, 2, 128>}, {transform_indices = @transform_1, window_bounds = array<i64: 1, 2, 128>}, {transform_indices = @transform_2, window_bounds = array<i64: 1, 2, 128>}]} {
    %c0 = arith.constant 0 : index
    %c0_0 = arith.constant 0 : index
    %c0_1 = arith.constant 0 : index
    %0 = vector.load %arg2[%c0, %c0_0, %c0_1] : memref<1x2x128xf32, #tpu.memory_space<vmem>>, vector<1x2x128xf32>
    %1 = vector.shape_cast %0 : vector<1x2x128xf32> to vector<2x128xf32>
    %c0_2 = arith.constant 0 : index
    %c0_3 = arith.constant 0 : index
    %c0_4 = arith.constant 0 : index
    %2 = vector.load %arg3[%c0_2, %c0_3, %c0_4] : memref<1x2x128xf32, #tpu.memory_space<vmem>>, vector<1x1x128xf32>
    %3 = vector.shape_cast %2 : vector<1x1x128xf32> to vector<1x128xf32>
    %c0_5 = arith.constant 0 : index
    %c1 = arith.constant 1 : index
    %c0_6 = arith.constant 0 : index
    %4 = vector.load %arg3[%c0_5, %c1, %c0_6] : memref<1x2x128xf32, #tpu.memory_space<vmem>>, vector<1x1x128xf32>
    %5 = vector.shape_cast %4 : vector<1x1x128xf32> to vector<1x128xf32>
    %6 = tpu.iota {dimensions = array<i32: 1>} : vector<1x128xi32>
    %cst = arith.constant 0.000000e+00 : f32
    %7 = vector.broadcast %cst : f32 to vector<2x128xf32>
    %c0_i32 = arith.constant 0 : i32
    %8 = vector.broadcast %c0_i32 : i32 to vector<1x128xi32>
    %9 = arith.cmpi sge, %6, %8 : vector<1x128xi32>
    %c32_i32 = arith.constant 32 : i32
    %10 = vector.broadcast %c32_i32 : i32 to vector<1x128xi32>
    %11 = arith.cmpi slt, %6, %10 : vector<1x128xi32>
    %12 = arith.andi %9, %11 : vector<1x128xi1>
    %13 = arith.extui %12 : vector<1x128xi1> to vector<1x128xi32>
    %14 = arith.sitofp %13 : vector<1x128xi32> to vector<1x128xf32>
    %15 = vector.broadcast %14 : vector<1x128xf32> to vector<2x128xf32>
    %16 = arith.mulf %1, %15 : vector<2x128xf32>
    %cst_7 = arith.constant dense<0.000000e+00> : vector<2xf32>
    %17 = vector.multi_reduction <add>, %16, %cst_7 [1] : vector<2x128xf32> to vector<2xf32>
    %18 = vector.shape_cast %17 : vector<2xf32> to vector<2x1xf32>
    %cst_8 = arith.constant 3.125000e-02 : f32
    %19 = vector.broadcast %cst_8 : f32 to vector<2x1xf32>
    %20 = arith.mulf %18, %19 : vector<2x1xf32>
    %21 = vector.broadcast %20 : vector<2x1xf32> to vector<2x128xf32>
    %22 = arith.subf %1, %21 : vector<2x128xf32>
    %23 = arith.mulf %22, %22 : vector<2x128xf32>
    %24 = vector.broadcast %14 : vector<1x128xf32> to vector<2x128xf32>
    %25 = arith.mulf %23, %24 : vector<2x128xf32>
    %cst_9 = arith.constant dense<0.000000e+00> : vector<2xf32>
    %26 = vector.multi_reduction <add>, %25, %cst_9 [1] : vector<2x128xf32> to vector<2xf32>
    %27 = vector.shape_cast %26 : vector<2xf32> to vector<2x1xf32>
    %cst_10 = arith.constant 3.125000e-02 : f32
    %28 = vector.broadcast %cst_10 : f32 to vector<2x1xf32>
    %29 = arith.mulf %27, %28 : vector<2x1xf32>
    %30 = vector.broadcast %14 : vector<1x128xf32> to vector<2x128xf32>
    %31 = arith.mulf %30, %22 : vector<2x128xf32>
    %cst_11 = arith.constant 9.99999974E-6 : f32
    %32 = vector.broadcast %cst_11 : f32 to vector<2x1xf32>
    %33 = arith.addf %29, %32 : vector<2x1xf32>
    %34 = math.rsqrt %33 : vector<2x1xf32>
    %35 = vector.broadcast %34 : vector<2x1xf32> to vector<2x128xf32>
    %36 = arith.mulf %31, %35 : vector<2x128xf32>
    %37 = arith.addf %7, %36 : vector<2x128xf32>
    %c32_i32_12 = arith.constant 32 : i32
    %38 = vector.broadcast %c32_i32_12 : i32 to vector<1x128xi32>
    %39 = arith.cmpi sge, %6, %38 : vector<1x128xi32>
    %c64_i32 = arith.constant 64 : i32
    %40 = vector.broadcast %c64_i32 : i32 to vector<1x128xi32>
    %41 = arith.cmpi slt, %6, %40 : vector<1x128xi32>
    %42 = arith.andi %39, %41 : vector<1x128xi1>
    %43 = arith.extui %42 : vector<1x128xi1> to vector<1x128xi32>
    %44 = arith.sitofp %43 : vector<1x128xi32> to vector<1x128xf32>
    %45 = vector.broadcast %44 : vector<1x128xf32> to vector<2x128xf32>
    %46 = arith.mulf %1, %45 : vector<2x128xf32>
    %cst_13 = arith.constant dense<0.000000e+00> : vector<2xf32>
    %47 = vector.multi_reduction <add>, %46, %cst_13 [1] : vector<2x128xf32> to vector<2xf32>
    %48 = vector.shape_cast %47 : vector<2xf32> to vector<2x1xf32>
    %cst_14 = arith.constant 3.125000e-02 : f32
    %49 = vector.broadcast %cst_14 : f32 to vector<2x1xf32>
    %50 = arith.mulf %48, %49 : vector<2x1xf32>
    %51 = vector.broadcast %50 : vector<2x1xf32> to vector<2x128xf32>
    %52 = arith.subf %1, %51 : vector<2x128xf32>
    %53 = arith.mulf %52, %52 : vector<2x128xf32>
    %54 = vector.broadcast %44 : vector<1x128xf32> to vector<2x128xf32>
    %55 = arith.mulf %53, %54 : vector<2x128xf32>
    %cst_15 = arith.constant dense<0.000000e+00> : vector<2xf32>
    %56 = vector.multi_reduction <add>, %55, %cst_15 [1] : vector<2x128xf32> to vector<2xf32>
    %57 = vector.shape_cast %56 : vector<2xf32> to vector<2x1xf32>
    %cst_16 = arith.constant 3.125000e-02 : f32
    %58 = vector.broadcast %cst_16 : f32 to vector<2x1xf32>
    %59 = arith.mulf %57, %58 : vector<2x1xf32>
    %60 = vector.broadcast %44 : vector<1x128xf32> to vector<2x128xf32>
    %61 = arith.mulf %60, %52 : vector<2x128xf32>
    %cst_17 = arith.constant 9.99999974E-6 : f32
    %62 = vector.broadcast %cst_17 : f32 to vector<2x1xf32>
    %63 = arith.addf %59, %62 : vector<2x1xf32>
    %64 = math.rsqrt %63 : vector<2x1xf32>
    %65 = vector.broadcast %64 : vector<2x1xf32> to vector<2x128xf32>
    %66 = arith.mulf %61, %65 : vector<2x128xf32>
    %67 = arith.addf %37, %66 : vector<2x128xf32>
    %c64_i32_18 = arith.constant 64 : i32
    %68 = vector.broadcast %c64_i32_18 : i32 to vector<1x128xi32>
    %69 = arith.cmpi sge, %6, %68 : vector<1x128xi32>
    %c96_i32 = arith.constant 96 : i32
    %70 = vector.broadcast %c96_i32 : i32 to vector<1x128xi32>
    %71 = arith.cmpi slt, %6, %70 : vector<1x128xi32>
    %72 = arith.andi %69, %71 : vector<1x128xi1>
    %73 = arith.extui %72 : vector<1x128xi1> to vector<1x128xi32>
    %74 = arith.sitofp %73 : vector<1x128xi32> to vector<1x128xf32>
    %75 = vector.broadcast %74 : vector<1x128xf32> to vector<2x128xf32>
    %76 = arith.mulf %1, %75 : vector<2x128xf32>
    %cst_19 = arith.constant dense<0.000000e+00> : vector<2xf32>
    %77 = vector.multi_reduction <add>, %76, %cst_19 [1] : vector<2x128xf32> to vector<2xf32>
    %78 = vector.shape_cast %77 : vector<2xf32> to vector<2x1xf32>
    %cst_20 = arith.constant 3.125000e-02 : f32
    %79 = vector.broadcast %cst_20 : f32 to vector<2x1xf32>
    %80 = arith.mulf %78, %79 : vector<2x1xf32>
    %81 = vector.broadcast %80 : vector<2x1xf32> to vector<2x128xf32>
    %82 = arith.subf %1, %81 : vector<2x128xf32>
    %83 = arith.mulf %82, %82 : vector<2x128xf32>
    %84 = vector.broadcast %74 : vector<1x128xf32> to vector<2x128xf32>
    %85 = arith.mulf %83, %84 : vector<2x128xf32>
    %cst_21 = arith.constant dense<0.000000e+00> : vector<2xf32>
    %86 = vector.multi_reduction <add>, %85, %cst_21 [1] : vector<2x128xf32> to vector<2xf32>
    %87 = vector.shape_cast %86 : vector<2xf32> to vector<2x1xf32>
    %cst_22 = arith.constant 3.125000e-02 : f32
    %88 = vector.broadcast %cst_22 : f32 to vector<2x1xf32>
    %89 = arith.mulf %87, %88 : vector<2x1xf32>
    %90 = vector.broadcast %74 : vector<1x128xf32> to vector<2x128xf32>
    %91 = arith.mulf %90, %82 : vector<2x128xf32>
    %cst_23 = arith.constant 9.99999974E-6 : f32
    %92 = vector.broadcast %cst_23 : f32 to vector<2x1xf32>
    %93 = arith.addf %89, %92 : vector<2x1xf32>
    %94 = math.rsqrt %93 : vector<2x1xf32>
    %95 = vector.broadcast %94 : vector<2x1xf32> to vector<2x128xf32>
    %96 = arith.mulf %91, %95 : vector<2x128xf32>
    %97 = arith.addf %67, %96 : vector<2x128xf32>
    %c96_i32_24 = arith.constant 96 : i32
    %98 = vector.broadcast %c96_i32_24 : i32 to vector<1x128xi32>
    %99 = arith.cmpi sge, %6, %98 : vector<1x128xi32>
    %c128_i32 = arith.constant 128 : i32
    %100 = vector.broadcast %c128_i32 : i32 to vector<1x128xi32>
    %101 = arith.cmpi slt, %6, %100 : vector<1x128xi32>
    %102 = arith.andi %99, %101 : vector<1x128xi1>
    %103 = arith.extui %102 : vector<1x128xi1> to vector<1x128xi32>
    %104 = arith.sitofp %103 : vector<1x128xi32> to vector<1x128xf32>
    %105 = vector.broadcast %104 : vector<1x128xf32> to vector<2x128xf32>
    %106 = arith.mulf %1, %105 : vector<2x128xf32>
    %cst_25 = arith.constant dense<0.000000e+00> : vector<2xf32>
    %107 = vector.multi_reduction <add>, %106, %cst_25 [1] : vector<2x128xf32> to vector<2xf32>
    %108 = vector.shape_cast %107 : vector<2xf32> to vector<2x1xf32>
    %cst_26 = arith.constant 3.125000e-02 : f32
    %109 = vector.broadcast %cst_26 : f32 to vector<2x1xf32>
    %110 = arith.mulf %108, %109 : vector<2x1xf32>
    %111 = vector.broadcast %110 : vector<2x1xf32> to vector<2x128xf32>
    %112 = arith.subf %1, %111 : vector<2x128xf32>
    %113 = arith.mulf %112, %112 : vector<2x128xf32>
    %114 = vector.broadcast %104 : vector<1x128xf32> to vector<2x128xf32>
    %115 = arith.mulf %113, %114 : vector<2x128xf32>
    %cst_27 = arith.constant dense<0.000000e+00> : vector<2xf32>
    %116 = vector.multi_reduction <add>, %115, %cst_27 [1] : vector<2x128xf32> to vector<2xf32>
    %117 = vector.shape_cast %116 : vector<2xf32> to vector<2x1xf32>
    %cst_28 = arith.constant 3.125000e-02 : f32
    %118 = vector.broadcast %cst_28 : f32 to vector<2x1xf32>
    %119 = arith.mulf %117, %118 : vector<2x1xf32>
    %120 = vector.broadcast %104 : vector<1x128xf32> to vector<2x128xf32>
    %121 = arith.mulf %120, %112 : vector<2x128xf32>
    %cst_29 = arith.constant 9.99999974E-6 : f32
    %122 = vector.broadcast %cst_29 : f32 to vector<2x1xf32>
    %123 = arith.addf %119, %122 : vector<2x1xf32>
    %124 = math.rsqrt %123 : vector<2x1xf32>
    %125 = vector.broadcast %124 : vector<2x1xf32> to vector<2x128xf32>
    %126 = arith.mulf %121, %125 : vector<2x128xf32>
    %127 = arith.addf %97, %126 : vector<2x128xf32>
    %128 = vector.broadcast %3 : vector<1x128xf32> to vector<2x128xf32>
    %129 = arith.mulf %128, %127 : vector<2x128xf32>
    %130 = vector.broadcast %5 : vector<1x128xf32> to vector<2x128xf32>
    %131 = arith.addf %129, %130 : vector<2x128xf32>
    %c0_30 = arith.constant 0 : index
    %c0_31 = arith.constant 0 : index
    %c0_32 = arith.constant 0 : index
    %132 = vector.load %arg4[%c0_30, %c0_31, %c0_32] : memref<1x2x128xf32, #tpu.memory_space<vmem>>, vector<1x2x128xf32>
    %133 = vector.shape_cast %132 : vector<1x2x128xf32> to vector<2x128xf32>
    %134 = vector.shape_cast %131 : vector<2x128xf32> to vector<1x2x128xf32>
    tpu.vector_store %arg4[%c0_30, %c0_31, %c0_32], %134 {strides = array<i32>} : memref<1x2x128xf32, #tpu.memory_space<vmem>>, vector<1x2x128xf32>,
    return
  }
  func.func @transform_0(%arg0: i32, %arg1: i32) -> (i32, i32, i32) {
    %c0_i32 = arith.constant 0 : i32
    %c0_i32_0 = arith.constant 0 : i32
    return %arg0, %arg1, %c0_i32 : i32, i32, i32
  }
  func.func @transform_1(%arg0: i32, %arg1: i32) -> (i32, i32, i32) {
    %c0_i32 = arith.constant 0 : i32
    %c0_i32_0 = arith.constant 0 : i32
    %c0_i32_1 = arith.constant 0 : i32
    return %arg0, %c0_i32, %c0_i32_0 : i32, i32, i32
  }
  func.func @transform_2(%arg0: i32, %arg1: i32) -> (i32, i32, i32) {
    %c0_i32 = arith.constant 0 : i32
    %c0_i32_0 = arith.constant 0 : i32
    return %arg0, %arg1, %c0_i32 : i32, i32, i32
  }
}

</mosaic_0001>

<llo_original>
// kernel: tpu_custom_call.1
$region0: #{tpu_custom_call.1}
  #allocation0 [shape = 'u32[]', space=smem, size = 0x4, offset = 0x4, fixed_abs, tag = 'smem constant byte address 0x4 - core index']
  #allocation1 [shape = 'u32[144,128]{1,0:T(1,128)}', space=vmem, size = 0x12000, scoped, tag = 'internal scratch']
  %s0 = inlined_call_operand.hbm [shape: f32[2,2,128], index: 0, kind: input, shape index: {}]
  %s1 = inlined_call_operand.hbm [shape: f32[2,2,128], index: 1, kind: input, shape index: {}]
  %s2 = inlined_call_operand.hbm [shape: f32[2,2,128], index: 2, kind: output, shape index: {}]
  %s3 = sld [smem:[#allocation0]]
  $region49: #{tpu_custom_call.1} parent=0
    _
  %s5 = ssub.s32 1, %s3
  %s6 = scalar_select 0, %s5, %s3
  $region1: #{tpu_custom_call.1} parent=0
    #allocation2 [shape = 'u8[2048]{0}', space=vmem, size = 0x800, scoped, tag = 'input window, operand 0']
    #allocation3 [shape = 's32[2]{0}', space=sflag, size = 0x8, scoped, tag = 'scoped memory for tpu_custom_call.1']
    #allocation4 [shape = 's32[2]{0}', space=sflag, size = 0x8, scoped, tag = 'scoped memory for tpu_custom_call.1']
    #allocation5 [shape = 'u8[2048]{0}', space=vmem, size = 0x800, scoped, tag = 'input window, operand 1']
    #allocation6 [shape = 's32[2]{0}', space=sflag, size = 0x8, scoped, tag = 'scoped memory for tpu_custom_call.1']
    #allocation7 [shape = 'u8[2048]{0}', space=vmem, size = 0x800, scoped, tag = 'output window, operand 0']
    %7 = vsyncpa [#allocation3], 0
    %s8 = scalar_lea.sflag [#allocation3], 1
    %9 = vsyncpa %s8, 0
    %10 = vsyncpa [#allocation6], 0
    %s11 = scalar_lea.sflag [#allocation6], 1
    %12 = vsyncpa %s11, 0
    %13 = vsyncpa [#allocation4], 0
    %s14 = scalar_lea.sflag [#allocation4], 1
    %15 = vsyncpa %s14, 0
    loop: start=0, step=1, limit=4
    $region2: #{tpu_custom_call.1} parent=1 // loop_pre_header
      _
    $region3: #{tpu_custom_call.1} parent=1 // loop_header
      %s17 = sphi 0, %s21
      %p18 = scmp.ge.s32.totalorder %s17, 4
      %s24 = sphi 0, %s36
      %s25 = sphi 0, %s32
      %s26 = sphi 0, %s24
      %s27 = sphi 0, %s25
      %s28 = sphi 0, %s26
      %s29 = sphi 0, %s27
      %s41 = sphi 0, %s43
      %s44 = sphi 0, %s41
      %s45 = sphi 0, %s44
      %s61 = sphi 0, %s45
      %s67 = sphi 0, %s69
      %s70 = sphi 0, %s67
      %s71 = sphi 0, %s70
      %s87 = sphi 0, %s71
      %s95 = sphi 0, %s97
      %s98 = sphi 0, %s95
      %s99 = sphi 0, %s98
      %s115 = sphi 0, %s99
    $region4: #{tpu_custom_call.1} parent=1 // loop_header_branch
      %20 = sbr.rel (%p18) target = $region8
    $region5: #{tpu_custom_call.1} parent=1 // loop_body
      %s22 = ssub.s32 %s17, 1
      %s23 = ssub.s32 %s17, 2
      %s30 = sadd.s32 1, %s25
      %p31 = scmp.ge.s32.totalorder %s30, 1
      %s32 = scalar_select %p31, 0, %s30
      %s33 = sadd.s32 1, %s24
      %s34 = scalar_select %p31, %s33, %s24
      %p35 = scmp.ge.s32.totalorder %s34, 2
      %s36 = scalar_select %p35, 0, %s34
      %s37 = ssub.s32 %s24, %s36
      %s38 = ssub.s32 %s25, %s32
      %s39 = sor.u32 %s37, %s38
      %p40 = scmp.eq.s32.totalorder %s39, 0
      %s42 = sadd.s32 %s41, 1
      %s43 = scalar_select %p40, %s41, %s42
      %p46 = pneg %p40
      %p47 = scmp.eq.s32.totalorder %s17, 1
      %p48 = por %p46, %p47
      %p49 = scmp.ne.s32.totalorder %s41, %s44
      %p50 = scmp.eq.s32.totalorder %s17, 0
      %p51 = por %p49, %p50
      %p52 = scmp.ne.s32.totalorder %s41, %s44
      %p53 = scmp.eq.s32.totalorder %s22, 1
      %p54 = por %p52, %p53
      %p55 = scmp.ne.s32.totalorder %s44, %s45
      %p56 = scmp.eq.s32.totalorder %s22, 0
      %p57 = por %p55, %p56
      %p58 = scmp.ne.s32.totalorder %s44, %s45
      %p59 = scmp.eq.s32.totalorder %s23, 1
      %p60 = por %p58, %p59
      %p62 = scmp.ne.s32.totalorder %s45, %s61
      %p63 = scmp.eq.s32.totalorder %s23, 0
      %p64 = por %p62, %p63
      %s65 = ssub.s32 %s24, %s36
      %p66 = scmp.eq.s32.totalorder %s65, 0
      %s68 = sadd.s32 %s67, 1
      %s69 = scalar_select %p66, %s67, %s68
      %p72 = pneg %p66
      %p73 = scmp.eq.s32.totalorder %s17, 1
      %p74 = por %p72, %p73
      %p75 = scmp.ne.s32.totalorder %s67, %s70
      %p76 = scmp.eq.s32.totalorder %s17, 0
      %p77 = por %p75, %p76
      %p78 = scmp.ne.s32.totalorder %s67, %s70
      %p79 = scmp.eq.s32.totalorder %s22, 1
      %p80 = por %p78, %p79
      %p81 = scmp.ne.s32.totalorder %s70, %s71
      %p82 = scmp.eq.s32.totalorder %s22, 0
      %p83 = por %p81, %p82
      %p84 = scmp.ne.s32.totalorder %s70, %s71
      %p85 = scmp.eq.s32.totalorder %s23, 1
      %p86 = por %p84, %p85
      %p88 = scmp.ne.s32.totalorder %s71, %s87
      %p89 = scmp.eq.s32.totalorder %s23, 0
      %p90 = por %p88, %p89
      %s91 = ssub.s32 %s24, %s36
      %s92 = ssub.s32 %s25, %s32
      %s93 = sor.u32 %s91, %s92
      %p94 = scmp.eq.s32.totalorder %s93, 0
      %s96 = sadd.s32 %s95, 1
      %s97 = scalar_select %p94, %s95, %s96
      %p100 = pneg %p94
      %p101 = scmp.eq.s32.totalorder %s17, 1
      %p102 = por %p100, %p101
      %p103 = scmp.ne.s32.totalorder %s95, %s98
      %p104 = scmp.eq.s32.totalorder %s17, 0
      %p105 = por %p103, %p104
      %p106 = scmp.ne.s32.totalorder %s95, %s98
      %p107 = scmp.eq.s32.totalorder %s22, 1
      %p108 = por %p106, %p107
      %p109 = scmp.ne.s32.totalorder %s98, %s99
      %p110 = scmp.eq.s32.totalorder %s22, 0
      %p111 = por %p109, %p110
      %p112 = scmp.ne.s32.totalorder %s98, %s99
      %p113 = scmp.eq.s32.totalorder %s23, 1
      %p114 = por %p112, %p113
      %p116 = scmp.ne.s32.totalorder %s99, %s115
      %p117 = scmp.eq.s32.totalorder %s23, 0
      %p118 = por %p116, %p117
      %p119 = scmp.le.s32.totalorder 1, %s17
      %p120 = scmp.lt.s32.totalorder %s17, 3
      %p121 = pnand %p119, %p120
      %p122 = pneg %p121
      // Predicated region
      $region9: #{tpu_custom_call.1} parent=5 // pred_check
        _
      $region10: #{tpu_custom_call.1} parent=5 // pred_check_branch
        %124 = sbr.rel (%p121) target = $region12
      $region11: #{tpu_custom_call.1} parent=5 // pred_region
        %s125 = ssub.s32 %s17, 1
      $region12: #{tpu_custom_call.1} parent=5 // pred_fallthru
        _
      %p126 = scmp.lt.s32.totalorder %s17, 2
      // Predicated region
      $region13: #{tpu_custom_call.1} parent=5 // pred_check
        %p127 = pneg %p126
      $region14: #{tpu_custom_call.1} parent=5 // pred_check_branch
        %129 = sbr.rel (%p127) target = $region16
      $region15: #{tpu_custom_call.1} parent=5 // pred_region
        // Predicated region
        $region17: #{tpu_custom_call.1} parent=15 // pred_check
          %p130 = pneg %p51
        $region18: #{tpu_custom_call.1} parent=15 // pred_check_branch
          %132 = sbr.rel (%p130) target = $region20
        $region19: #{tpu_custom_call.1} parent=15 // pred_region
          %s133 = sand.u32 %s41, 1
          %s134 = scalar_lea.sflag [#allocation3], %s133
          %s135 = sand.u32 %s41, 1
          %s136 = smul.addr %s135, 2
          %s137 = scalar_lea.vmem [#allocation2], %s136
          %s139 = ssub.s32 32, 32
          %140 = vsyncadd %s134, %s139
          %s141 = sadd.s32 %s25, %s24
          %s142 = smul.addr %s141, 32
          %s143 = scalar_lea.hbm %s0, %s142
          %s145 = sshll.u32 %s137, 4
          %s146 = int_to_ptr.vmem [resolvable:$true] %s145
          %148 = dma.hbm_to_vmem [thread:$0]  %s143, 32, %s146, %s134
        $region20: #{tpu_custom_call.1} parent=15 // pred_fallthru
          _
        // Predicated region
        $region21: #{tpu_custom_call.1} parent=15 // pred_check
          %p149 = pneg %p77
        $region22: #{tpu_custom_call.1} parent=15 // pred_check_branch
          %151 = sbr.rel (%p149) target = $region24
        $region23: #{tpu_custom_call.1} parent=15 // pred_region
          %s152 = sand.u32 %s67, 1
          %s153 = scalar_lea.sflag [#allocation6], %s152
          %s154 = sand.u32 %s67, 1
          %s155 = smul.addr %s154, 2
          %s156 = scalar_lea.vmem [#allocation5], %s155
          %s158 = ssub.s32 32, 32
          %159 = vsyncadd %s153, %s158
          %s160 = smul.addr %s24, 32
          %s161 = scalar_lea.hbm %s1, %s160
          %s163 = sshll.u32 %s156, 4
          %s164 = int_to_ptr.vmem [resolvable:$true] %s163
          %166 = dma.hbm_to_vmem [thread:$0]  %s161, 32, %s164, %s153
        $region24: #{tpu_custom_call.1} parent=15 // pred_fallthru
          _
      $region16: #{tpu_custom_call.1} parent=5 // pred_fallthru
        _
      %p167 = scmp.le.s32.totalorder 1, %s17
      %p168 = scmp.lt.s32.totalorder %s17, 3
      %p169 = pnand %p167, %p168
      %p170 = pneg %p169
      // Predicated region
      $region25: #{tpu_custom_call.1} parent=5 // pred_check
        _
      $region26: #{tpu_custom_call.1} parent=5 // pred_check_branch
        %172 = sbr.rel (%p169) target = $region28
      $region27: #{tpu_custom_call.1} parent=5 // pred_region
        %s173 = ssub.s32 %s17, 1
        %s174 = sand.u32 %s44, 1
        %s175 = scalar_lea.sflag [#allocation3], %s174
        %s176 = sand.u32 %s44, 1
        %s177 = smul.addr %s176, 2
        %s178 = scalar_lea.vmem [#allocation2], %s177
        // Predicated region
        $region29: #{tpu_custom_call.1} parent=27 // pred_check
          %p179 = pneg %p57
        $region30: #{tpu_custom_call.1} parent=27 // pred_check_branch
          %181 = sbr.rel (%p179) target = $region32
        $region31: #{tpu_custom_call.1} parent=27 // pred_region
          %182 = dma.done %s175, 32
        $region32: #{tpu_custom_call.1} parent=27 // pred_fallthru
          _
        %s183 = sand.u32 %s70, 1
        %s184 = scalar_lea.sflag [#allocation6], %s183
        %s185 = sand.u32 %s70, 1
        %s186 = smul.addr %s185, 2
        %s187 = scalar_lea.vmem [#allocation5], %s186
        // Predicated region
        $region33: #{tpu_custom_call.1} parent=27 // pred_check
          %p188 = pneg %p83
        $region34: #{tpu_custom_call.1} parent=27 // pred_check_branch
          %190 = sbr.rel (%p188) target = $region36
        $region35: #{tpu_custom_call.1} parent=27 // pred_region
          %191 = dma.done %s184, 32
        $region36: #{tpu_custom_call.1} parent=27 // pred_fallthru
          _
        %s192 = sand.u32 %s44, 1
        %s193 = scalar_lea.sflag [#allocation3], %s192
        %s194 = sand.u32 %s44, 1
        %s195 = smul.addr %s194, 2
        %s196 = scalar_lea.vmem [#allocation2], %s195
        %p197 = pneg %p57
        %p198 = pneg %p54
        %s199 = sand.u32 %s70, 1
        %s200 = scalar_lea.sflag [#allocation6], %s199
        %s201 = sand.u32 %s70, 1
        %s202 = smul.addr %s201, 2
        %s203 = scalar_lea.vmem [#allocation5], %s202
        %p204 = pneg %p83
        %p205 = pneg %p80
        %p206 = pneg %p111
        %p207 = pneg %p108
        %s208 = sand.u32 %s98, 1
        %s209 = scalar_lea.sflag [#allocation4], %s208
        %s210 = sand.u32 %s98, 1
        %s211 = smul.addr %s210, 2
        %s212 = scalar_lea.vmem [#allocation7], %s211
        %v213 = vld [vmem:[%s178] sm:$0x3]
        %v214 = vld [vmem:[%s187] sm:$0x1]
        %v215 = vld [vmem:[%s187 + $0x1] sm:$0x1]
        %v216 = vlaneseq
        %v217 = vand.u32 %v216, 127
        %vm218 = vcmp.ge.s32.totalorder %v217, 0
        %vm219 = vcmp.lt.s32.totalorder %v217, 32
        %vm220 = vmand %vm218, %vm219
        %v221 = vsel %vm220, 1, 0
        %v222 = vcvt.s32.f32 %v221
        %v223 = vmul.f32 %v213, %v222
        %vm224 = vcmask 1041408
        %v225 = vsel %vm224, %v223, 0.0
        %226 = vadd.xlane.f32.xlu0 %v225
        %v227 = vpop.xlane.xlu0 %226
        %v228 = vmul.f32 %v227, 0.03125
        %v229 = vsub.f32 %v213, %v228
        %v230 = vmul.f32 %v229, %v229
        %v231 = vmul.f32 %v230, %v222
        %v232 = vsel %vm224, %v231, 0.0
        %233 = vadd.xlane.f32.xlu0 %v232
        %v234 = vpop.xlane.xlu0 %233
        %v235 = vmul.f32 %v234, 0.03125
        %v236 = vmul.f32 %v222, %v229
        %v237 = vadd.f32 %v235, 1e-05
        %v238 = vrsqrt.pop %v237
        %v239 = vmul.f32 %v236, %v238
        %v240 = vadd.f32 %v239, 0.0
        %vm241 = vcmp.ge.s32.totalorder %v217, 32
        %vm242 = vcmp.lt.s32.totalorder %v217, 64
        %vm243 = vmand %vm241, %vm242
        %v244 = vsel %vm243, 1, 0
        %v245 = vcvt.s32.f32 %v244
        %v246 = vmul.f32 %v213, %v245
        %v247 = vsel %vm224, %v246, 0.0
        %248 = vadd.xlane.f32.xlu0 %v247
        %v249 = vpop.xlane.xlu0 %248
        %v250 = vmul.f32 %v249, 0.03125
        %v251 = vsub.f32 %v213, %v250
        %v252 = vmul.f32 %v251, %v251
        %v253 = vmul.f32 %v252, %v245
        %v254 = vsel %vm224, %v253, 0.0
        %255 = vadd.xlane.f32.xlu0 %v254
        %v256 = vpop.xlane.xlu0 %255
        %v257 = vmul.f32 %v256, 0.03125
        %v258 = vmul.f32 %v245, %v251
        %v259 = vadd.f32 %v257, 1e-05
        %v260 = vrsqrt.pop %v259
        %v261 = vmul.f32 %v258, %v260
        %v262 = vadd.f32 %v240, %v261
        %vm263 = vcmp.ge.s32.totalorder %v217, 64
        %vm264 = vcmp.lt.s32.totalorder %v217, 96
        %vm265 = vmand %vm263, %vm264
        %v266 = vsel %vm265, 1, 0
        %v267 = vcvt.s32.f32 %v266
        %v268 = vmul.f32 %v213, %v267
        %v269 = vsel %vm224, %v268, 0.0
        %270 = vadd.xlane.f32.xlu0 %v269
        %v271 = vpop.xlane.xlu0 %270
        %v272 = vmul.f32 %v271, 0.03125
        %v273 = vsub.f32 %v213, %v272
        %v274 = vmul.f32 %v273, %v273
        %v275 = vmul.f32 %v274, %v267
        %v276 = vsel %vm224, %v275, 0.0
        %277 = vadd.xlane.f32.xlu0 %v276
        %v278 = vpop.xlane.xlu0 %277
        %v279 = vmul.f32 %v278, 0.03125
        %v280 = vmul.f32 %v267, %v273
        %v281 = vadd.f32 %v279, 1e-05
        %v282 = vrsqrt.pop %v281
        %v283 = vmul.f32 %v280, %v282
        %v284 = vadd.f32 %v262, %v283
        %vm285 = vcmp.ge.s32.totalorder %v217, 96
        %vm286 = vcmp.lt.s32.totalorder %v217, 128
        %vm287 = vmand %vm285, %vm286
        %v288 = vsel %vm287, 1, 0
        %v289 = vcvt.s32.f32 %v288
        %v290 = vmul.f32 %v213, %v289
        %v291 = vsel %vm224, %v290, 0.0
        %292 = vadd.xlane.f32.xlu0 %v291
        %v293 = vpop.xlane.xlu0 %292
        %v294 = vmul.f32 %v293, 0.03125
        %v295 = vsub.f32 %v213, %v294
        %v296 = vmul.f32 %v295, %v295
        %v297 = vmul.f32 %v296, %v289
        %v298 = vsel %vm224, %v297, 0.0
        %299 = vadd.xlane.f32.xlu0 %v298
        %v300 = vpop.xlane.xlu0 %299
        %v301 = vmul.f32 %v300, 0.03125
        %v302 = vmul.f32 %v289, %v295
        %v303 = vadd.f32 %v301, 1e-05
        %v304 = vrsqrt.pop %v303
        %v305 = vmul.f32 %v302, %v304
        %v306 = vadd.f32 %v284, %v305
        %v307 = vlaneseq
        %v308 = vshrl.u32 %v307, 7
        %v309 = vsub.s32 0, %v308
        %v310 = vrot.slane %v214, %v309
        %v311 = vmul.f32 %v310, %v306
        %v312 = vlaneseq
        %v313 = vshrl.u32 %v312, 7
        %v314 = vsub.s32 0, %v313
        %v315 = vrot.slane %v215, %v314
        %v316 = vadd.f32 %v311, %v315
        %317 = vst [vmem:[%s212] sm:$0x3] %v316
        %s318 = sand.u32 %s98, 1
        %s319 = scalar_lea.sflag [#allocation4], %s318
        %s320 = sand.u32 %s98, 1
        %s321 = smul.addr %s320, 2
        %s322 = scalar_lea.vmem [#allocation7], %s321
        // Predicated region
        $region37: #{tpu_custom_call.1} parent=27 // pred_check
          %p323 = pneg %p108
        $region38: #{tpu_custom_call.1} parent=27 // pred_check_branch
          %325 = sbr.rel (%p323) target = $region40
        $region39: #{tpu_custom_call.1} parent=27 // pred_region
          %s327 = ssub.s32 32, 32
          %328 = vsyncadd %s319, %s327
          %s329 = sadd.s32 %s27, %s26
          %s330 = smul.addr %s329, 32
          %s331 = scalar_lea.hbm %s2, %s330
          %s333 = sshll.u32 %s322, 4
          %s334 = int_to_ptr.vmem [resolvable:$true] %s333
          %336 = dma.vmem_to_hbm [thread:$0]  %s334, 32, %s331, %s319
        $region40: #{tpu_custom_call.1} parent=27 // pred_fallthru
          _
      $region28: #{tpu_custom_call.1} parent=5 // pred_fallthru
        _
      %p337 = scmp.le.s32.totalorder 2, %s17
      // Predicated region
      $region41: #{tpu_custom_call.1} parent=5 // pred_check
        %p338 = pneg %p337
      $region42: #{tpu_custom_call.1} parent=5 // pred_check_branch
        %340 = sbr.rel (%p338) target = $region44
      $region43: #{tpu_custom_call.1} parent=5 // pred_region
        %s341 = ssub.s32 %s17, 2
        // Predicated region
        $region45: #{tpu_custom_call.1} parent=43 // pred_check
          %p342 = pneg %p114
        $region46: #{tpu_custom_call.1} parent=43 // pred_check_branch
          %344 = sbr.rel (%p342) target = $region48
        $region47: #{tpu_custom_call.1} parent=43 // pred_region
          %s345 = sand.u32 %s99, 1
          %s346 = scalar_lea.sflag [#allocation4], %s345
          %s347 = sand.u32 %s99, 1
          %s348 = smul.addr %s347, 2
          %s349 = scalar_lea.vmem [#allocation7], %s348
          %350 = dma.done %s346, 32
        $region48: #{tpu_custom_call.1} parent=43 // pred_fallthru
          _
      $region44: #{tpu_custom_call.1} parent=5 // pred_fallthru
        _
    $region6: #{tpu_custom_call.1} parent=1 // loop_footer
      %s21 = sadd.s32 1, %s17
    $region7: #{tpu_custom_call.1} parent=1 // loop_footer_branch
      %16 = sbr.rel target = $region3
    $region8: #{tpu_custom_call.1} parent=1 // loop_exit
      _
    %351 = vsyncpa [#allocation3], 1
    %s352 = scalar_lea.sflag [#allocation3], 1
    %353 = vsyncpa %s352, 1
    %354 = vsyncpa [#allocation6], 1
    %s355 = scalar_lea.sflag [#allocation6], 1
    %356 = vsyncpa %s355, 1
    %357 = vsyncpa [#allocation4], 1
    %s358 = scalar_lea.sflag [#allocation4], 1
    %359 = vsyncpa %s358, 1

</llo_original>
